<compile_context>
chip_gen: v6e
topology: v6e:2x2x1
jax: 0.10.0
libtpu: 0.0.40
codegen_flags: <defaults>
</compile_context>

<pallas_src>
import functools
import math

import numpy as np
import jax
import jax.numpy as jnp
from jax.experimental import pallas as pl
from jax.experimental.pallas import tpu as pltpu


_MAX_TILE_ROWS = 4096   # packed (128-lane) rows per output block (<= 2 MiB f32)
_TWIDDLE_K = 16         # fine-table repeats per coarse group (sin cut ~ 2/K)


def _cdiv(a, b):
    return -(-a // b)


def _round_up(x, m):
    return _cdiv(x, m) * m


def _local_tables(n_rows, out_ch, half, channels, temperature, c):
    """Host-side (numpy, float64) angle / frequency tables for local packed rows.

    For local packed row s and lane l, flat = s*128 + l indexes the row-major
    (L, out_ch) matrix relative to a base flat offset that is a multiple of
    out_ch (guaranteed by tile alignment).  Returns
        theta[s, l]   = (flat - col + out_ch) * c * inv_freq(col) + phase(col)
        freq128[s, l] = 128 * c * inv_freq(col)
    so the full sin() argument for global packed row (B + s) is
        B * freq128[s, l] + theta[s, l]  ==  (row + 1)*norm_mult*inv_freq + phase
    (cos columns use phase = pi/2, i.e. cos(x) = sin(x + pi/2)).
    """
    s = np.arange(n_rows, dtype=np.float64)[:, None]
    l = np.arange(128, dtype=np.float64)[None, :]
    flat = s * 128.0 + l
    col = np.mod(flat, out_ch)
    j = np.where(col < half, col, col - half)
    inv_freq = np.power(float(temperature), -2.0 * j / float(channels))
    phase = np.where(col < half, 0.0, np.pi / 2.0)
    theta = (flat - col + out_ch) * c * inv_freq + phase
    freq128 = 128.0 * c * inv_freq
    return theta, freq128


def _direct_kernel(freq_ref, theta_ref, out_ref, *, tile_rows):
    """Fallback path: one full-width FMA + per-element sin, lane-dense store."""
    base = (pl.program_id(0) * tile_rows).astype(jnp.float32)
    arg = base * freq_ref[...] + theta_ref[...]
    out_ref[...] = jnp.sin(arg).astype(out_ref.dtype)


def _twiddle_kernel(sf_ref, cf_ref, cfreq_ref, out_ref, *, bg, q, k, tile_rows):
    """Twiddle path: sin(theta_c + theta_f) via the angle-addition identity.

    sf_ref/cf_ref: (k, q, 128) host-precomputed sin/cos of the fine angles.
    cfreq_ref:     (q, 128)    coarse angle per unit packed row (128*c*inv_freq).
    """
    n_qq = tile_rows // bg
    base = (pl.program_id(0) * tile_rows).astype(jnp.float32)
    qq = jax.lax.broadcasted_iota(jnp.int32, (n_qq, q, 128), 0).astype(jnp.float32)
    theta_c = (base + qq * jnp.float32(bg)) * cfreq_ref[...]        # (n_qq,q,128)
    sc = jnp.sin(theta_c).reshape(n_qq, 1, q, 128)
    cc = jnp.cos(theta_c).reshape(n_qq, 1, q, 128)
    sf = sf_ref[...]                                                # (k,q,128)
    cf = cf_ref[...]
    val = sc * cf + cc * sf                                         # (n_qq,k,q,128)
    out_ref[...] = val.reshape(tile_rows, 128).astype(out_ref.dtype)


def positional_encoding_1d(x_len, orig_ch, *, channels, temperature,
                           normalize, scale, dtype):
    """Returns the (x_len, min(orig_ch, channels)) positional-encoding matrix."""
    if channels % 2 != 0:
        # The PyTorch reference itself fails for odd num_pos_feats (the sin/cos
        # concat is channels+1 wide and cannot be assigned into the buffer).
        raise NotImplementedError('num_pos_feats must be even')
    out_ch = min(int(orig_ch), int(channels))
    half = channels // 2
    norm_mult = (float(scale) / (float(x_len) + 1e-06)) if normalize else 1.0
    c = norm_mult / float(out_ch)

    total_flat = x_len * out_ch
    total_rows = _cdiv(total_flat, 128)             # packed 128-lane rows
    g = math.gcd(out_ch, 128)
    p = out_ch // g                                  # pattern period (packed rows)
    q = (p * 8) // math.gcd(p, 8)                    # lcm(p, 8): 8-aligned period

    # Twiddle eligibility: keep the host fine tables small and the savings real.
    use_twiddle = (q <= 64) and (total_rows >= 32 * q)
    if use_twiddle:
        k_rep = min(_TWIDDLE_K, total_rows // (8 * q))   # >= 4
        bg = k_rep * q                                    # fine-table rows
        row_align = bg
    else:
        k_rep = bg = 0
        row_align = q

    # Tile sizing: large tiles to amortize grid-step overhead, but an even
    # number of balanced blocks so v7x's two TensorCores both stay busy.
    can_multi = row_align <= _MAX_TILE_ROWS
    if can_multi and total_rows >= max(2 * row_align, 512):
        nb = max(2, _cdiv(total_rows, _MAX_TILE_ROWS))
        nb += nb & 1                                     # even block count
        tile_rows = _round_up(_cdiv(total_rows, nb), row_align)
        padded_rows = _round_up(total_rows, 8)
        num_blocks = _cdiv(padded_rows, tile_rows)       # last block may be partial
    else:
        # TODO(synk): a single huge block with a pathological pattern period
        # (q > _MAX_TILE_ROWS needs out_ch > 512 and a non-divisor of 128)
        # could exceed VMEM; unreachable for realistic channel counts.
        tile_rows = _round_up(max(total_rows, 1), row_align if use_twiddle else 8)
        padded_rows = tile_rows
        num_blocks = 1

    itemsize = jnp.dtype(dtype).itemsize
    out_shape = jax.ShapeDtypeStruct((padded_rows, 128), dtype)
    out_spec = pl.BlockSpec((tile_rows, 128), lambda i: (i, 0))

    if use_twiddle:
        theta_f, _ = _local_tables(bg, out_ch, half, channels, temperature, c)
        _, freq_q = _local_tables(q, out_ch, half, channels, temperature, c)
        sf = jnp.asarray(np.sin(theta_f).reshape(k_rep, q, 128), dtype=jnp.float32)
        cf = jnp.asarray(np.cos(theta_f).reshape(k_rep, q, 128), dtype=jnp.float32)
        cfreq = jnp.asarray(freq_q, dtype=jnp.float32)
        kernel = functools.partial(_twiddle_kernel, bg=bg, q=q, k=k_rep,
                                   tile_rows=tile_rows)
        in_specs = [pl.BlockSpec((k_rep, q, 128), lambda i: (0, 0, 0)),
                    pl.BlockSpec((k_rep, q, 128), lambda i: (0, 0, 0)),
                    pl.BlockSpec((q, 128), lambda i: (0, 0))]
        args = (sf, cf, cfreq)
        flops = 6 * num_blocks * tile_rows * 128
        n_trans = 2 * num_blocks * (tile_rows // bg) * q * 128
        in_bytes = (2 * bg + q) * 128 * 4
    else:
        theta_t, freq_t = _local_tables(tile_rows, out_ch, half, channels,
                                        temperature, c)
        freq_arr = jnp.asarray(freq_t, dtype=jnp.float32)
        theta_arr = jnp.asarray(theta_t, dtype=jnp.float32)
        kernel = functools.partial(_direct_kernel, tile_rows=tile_rows)
        in_specs = [pl.BlockSpec((tile_rows, 128), lambda i: (0, 0)),
                    pl.BlockSpec((tile_rows, 128), lambda i: (0, 0))]
        args = (freq_arr, theta_arr)
        flops = 3 * num_blocks * tile_rows * 128
        n_trans = num_blocks * tile_rows * 128
        in_bytes = 2 * tile_rows * 128 * 4

    cost = pl.CostEstimate(
        flops=flops,
        transcendentals=n_trans,
        bytes_accessed=padded_rows * 128 * itemsize + in_bytes)

    emb = pl.pallas_call(
        kernel,
        out_shape=out_shape,
        grid=(num_blocks,),
        in_specs=in_specs,
        out_specs=out_spec,
        compiler_params=pltpu.CompilerParams(
            dimension_semantics=("parallel",),
            vmem_limit_bytes=32 * 1024 * 1024),
        cost_estimate=cost,
    )(*args)

    if padded_rows * 128 == total_flat:
        return emb.reshape(x_len, out_ch)
    # Flat-tail slice: drop the padded elements of the packed slab.
    return emb.reshape(-1)[:total_flat].reshape(x_len, out_ch)


class PositionalEncoding1D:
    """JAX/Pallas re-implementation of the PyTorch PositionalEncoding1D."""

    def __init__(self, num_pos_feats=64, temperature=10000, normalize=False,
                 scale=None):
        self.channels = int(num_pos_feats)
        if scale is not None and normalize is False:
            raise ValueError('normalize should be True if scale is passed')
        if scale is None:
            scale = 2 * math.pi
        self.scale = float(scale)
        self.normalize = bool(normalize)
        self.temperature = float(temperature)

    def __call__(self, tensor):
        if tensor.ndim != 2:
            raise RuntimeError('The input tensor has to be 2D!')
        x_len, orig_ch = tensor.shape
        return positional_encoding_1d(
            int(x_len), int(orig_ch), channels=self.channels,
            temperature=self.temperature, normalize=self.normalize,
            scale=self.scale, dtype=tensor.dtype)


def _reference(tensor, channels, temperature, normalize, scale):
    """Pure-JAX mirror of the PyTorch forward."""
    x_len, orig_ch = tensor.shape
    pos_x = jnp.arange(1, x_len + 1, dtype=jnp.float32)
    if normalize:
        eps = 1e-06
        pos_x = pos_x / (pos_x[-1:] + eps) * scale
    dim_t = jnp.arange(0, channels, 2, dtype=jnp.float32)
    inv_freq = 1.0 / (temperature ** (dim_t / channels))
    sin_inp = jnp.einsum('i,j->ij', pos_x, inv_freq)
    emb_x = jnp.concatenate([jnp.sin(sin_inp), jnp.cos(sin_inp)], axis=-1)
    emb = jnp.zeros((x_len, channels), dtype=jnp.float32)
    emb = emb.at[:, :channels].set(emb_x)
    return emb[:, :orig_ch].astype(tensor.dtype)


if __name__ == "__main__":
    key = jax.random.PRNGKey(0)
    # (seq_len, orig_ch, num_pos_feats, normalize, scale, dtype, atol)
    configs = [
        (16,   48, 64, False, None, jnp.float32,  5e-5),  # direct, tiny, padded tail
        (64,   64, 64, True,  None, jnp.float32,  5e-5),  # direct, exact packing
        (1300, 40, 64, True,  None, jnp.float32,  5e-5),  # direct, single block, tail
        (3000, 40, 64, True,  None, jnp.float32,  5e-5),  # direct, 2 blocks, partial last
        (2560, 96, 64, True,  3.0,  jnp.float32,  5e-5),  # twiddle P=1, 2 x 640 blocks
        (4096, 96, 96, True,  None, jnp.float32,  5e-5),  # twiddle P=3, 2 x 1536 blocks
        # Unnormalized long sequence: both kernel and reference lose ulps in the
        # f32 angle for large arguments, so compare with a looser atol.
        (2048, 64, 64, False, None, jnp.float32,  2e-3),
        (32,   64, 64, False, None, jnp.bfloat16, 1e-2),  # bf16 in-kernel cast
    ]
    for (seq_len, orig_ch, feats, normalize, scale, dtype, atol) in configs:
        key, sub = jax.random.split(key)
        # Input tensor (len, c): only its shape/dtype matter for this module.
        x = jax.random.normal(sub, (seq_len, orig_ch), dtype=dtype)
        module = PositionalEncoding1D(num_pos_feats=feats, temperature=10000,
                                      normalize=normalize, scale=scale)
        out = jax.block_until_ready(module(x))
        ref = _reference(x, module.channels, module.temperature,
                         module.normalize, module.scale)
        out_ch = min(orig_ch, feats)
        assert out.shape == (seq_len, out_ch), (out.shape, (seq_len, out_ch))
        assert out.dtype == x.dtype, (out.dtype, x.dtype)
        assert jnp.allclose(out.astype(jnp.float32), ref.astype(jnp.float32),
                            atol=atol, rtol=1e-5), \
            f"mismatch vs reference for config {(seq_len, orig_ch, feats, dtype)}"

    print("KERNEL_OK")
</pallas_src>

<mosaic_0001>
module attributes {stable_mosaic.version = 11 : i64} {
  func.func @_direct_kernel(%arg0: i32, %arg1: memref<8x128xf32, #tpu.memory_space<vmem>>, %arg2: memref<8x128xf32, #tpu.memory_space<vmem>>, %arg3: memref<8x128xf32, #tpu.memory_space<vmem>>) attributes {dimension_semantics = [#tpu.dimension_semantics<parallel>], iteration_bounds = array<i64: 1>, scalar_prefetch = 0 : i64, scratch_operands = 0 : i64, tpu.core_type = #tpu.core_type<tc>, window_params = [{pipeline_mode = #tpu.pipeline_mode<synchronous>, transform_indices = @transform_0, window_bounds = array<i64: 8, 128>}, {pipeline_mode = #tpu.pipeline_mode<synchronous>, transform_indices = @transform_1, window_bounds = array<i64: 8, 128>}, {transform_indices = @transform_2, window_bounds = array<i64: 8, 128>}]} {
    %c8_i32 = arith.constant 8 : i32
    %0 = arith.muli %arg0, %c8_i32 : i32
    %1 = arith.sitofp %0 : i32 to f32
    %c0 = arith.constant 0 : index
    %c0_0 = arith.constant 0 : index
    %2 = vector.load %arg1[%c0, %c0_0] : memref<8x128xf32, #tpu.memory_space<vmem>>, vector<8x128xf32>
    %3 = vector.broadcast %1 : f32 to vector<8x128xf32>
    %4 = arith.mulf %3, %2 : vector<8x128xf32>
    %c0_1 = arith.constant 0 : index
    %c0_2 = arith.constant 0 : index
    %5 = vector.load %arg2[%c0_1, %c0_2] : memref<8x128xf32, #tpu.memory_space<vmem>>, vector<8x128xf32>
    %6 = arith.addf %4, %5 : vector<8x128xf32>
    %7 = math.sin %6 : vector<8x128xf32>
    %c0_3 = arith.constant 0 : index
    %c0_4 = arith.constant 0 : index
    %8 = vector.load %arg3[%c0_3, %c0_4] : memref<8x128xf32, #tpu.memory_space<vmem>>, vector<8x128xf32>
    tpu.vector_store %arg3[%c0_3, %c0_4], %7 {strides = array<i32>} : memref<8x128xf32, #tpu.memory_space<vmem>>, vector<8x128xf32>,
    return
  }
  func.func @transform_0(%arg0: i32) -> (i32, i32) {
    %c0_i32 = arith.constant 0 : i32
    %c0_i32_0 = arith.constant 0 : i32
    %c0_i32_1 = arith.constant 0 : i32
    return %c0_i32, %c0_i32_0 : i32, i32
  }
  func.func @transform_1(%arg0: i32) -> (i32, i32) {
    %c0_i32 = arith.constant 0 : i32
    %c0_i32_0 = arith.constant 0 : i32
    %c0_i32_1 = arith.constant 0 : i32
    return %c0_i32, %c0_i32_0 : i32, i32
  }
  func.func @transform_2(%arg0: i32) -> (i32, i32) {
    %c0_i32 = arith.constant 0 : i32
    %c0_i32_0 = arith.constant 0 : i32
    return %arg0, %c0_i32 : i32, i32
  }
}

</mosaic_0001>

<llo_original>
// kernel: tpu_custom_call.1
$region0: #{tpu_custom_call.1}
  #allocation0 [shape = 'u32[]', space=smem, size = 0x4, offset = 0x4, fixed_abs, tag = 'smem constant byte address 0x4 - core index']
  #allocation1 [shape = 'u32[144,128]{1,0:T(1,128)}', space=vmem, size = 0x12000, scoped, tag = 'internal scratch']
  %s0 = inlined_call_operand.hbm [shape: f32[8,128], index: 0, kind: input, shape index: {}]
  %s1 = inlined_call_operand.hbm [shape: f32[8,128], index: 1, kind: input, shape index: {}]
  %s2 = inlined_call_operand.hbm [shape: f32[8,128], index: 2, kind: output, shape index: {}]
  %s3 = sld [smem:[#allocation0]]
  $region26: #{tpu_custom_call.1} parent=0
    _
  %s5 = ssub.s32 1, %s3
  %s6 = scalar_select 0, %s5, %s3
  $region1: #{tpu_custom_call.1} parent=0
    #allocation2 [shape = 'u8[4096]{0}', space=vmem, size = 0x1000, scoped, tag = 'input window, operand 0, single buffered']
    #allocation3 [shape = 's32[1]{0}', space=sflag, size = 0x4, scoped, tag = 'scoped memory for tpu_custom_call.1']
    #allocation4 [shape = 's32[1]{0}', space=sflag, size = 0x4, scoped, tag = 'scoped memory for tpu_custom_call.1']
    #allocation5 [shape = 'u8[4096]{0}', space=vmem, size = 0x1000, scoped, tag = 'input window, operand 1, single buffered']
    #allocation6 [shape = 's32[1]{0}', space=sflag, size = 0x4, scoped, tag = 'scoped memory for tpu_custom_call.1']
    #allocation7 [shape = 'u8[4096]{0}', space=vmem, size = 0x1000, scoped, tag = 'output window, operand 0, single buffered']
    %7 = vsyncpa [#allocation3], 0
    %8 = vsyncpa [#allocation6], 0
    %9 = vsyncpa [#allocation4], 0
    // Predicated region
    $region2: #{tpu_custom_call.1} parent=1 // pred_check
      _
    $region3: #{tpu_custom_call.1} parent=1 // pred_check_branch
      %11 = sbr.rel (0) target = $region5
    $region4: #{tpu_custom_call.1} parent=1 // pred_region
      %s13 = ssub.s32 128, 128
      %14 = vsyncadd [#allocation3], %s13
      %s16 = sshll.u32 [#allocation2], 4
      %s17 = int_to_ptr.vmem [resolvable:$true] %s16
      %19 = dma.hbm_to_vmem [thread:$0]  %s0, 128, %s17, [#allocation3]
    $region5: #{tpu_custom_call.1} parent=1 // pred_fallthru
      _
    // Predicated region
    $region6: #{tpu_custom_call.1} parent=1 // pred_check
      _
    $region7: #{tpu_custom_call.1} parent=1 // pred_check_branch
      %21 = sbr.rel (0) target = $region9
    $region8: #{tpu_custom_call.1} parent=1 // pred_region
      %s23 = ssub.s32 128, 128
      %24 = vsyncadd [#allocation6], %s23
      %s26 = sshll.u32 [#allocation5], 4
      %s27 = int_to_ptr.vmem [resolvable:$true] %s26
      %29 = dma.hbm_to_vmem [thread:$0]  %s1, 128, %s27, [#allocation6]
    $region9: #{tpu_custom_call.1} parent=1 // pred_fallthru
      _
    // Predicated region
    $region10: #{tpu_custom_call.1} parent=1 // pred_check
      _
    $region11: #{tpu_custom_call.1} parent=1 // pred_check_branch
      %31 = sbr.rel (0) target = $region13
    $region12: #{tpu_custom_call.1} parent=1 // pred_region
      %32 = dma.done [#allocation3], 128
    $region13: #{tpu_custom_call.1} parent=1 // pred_fallthru
      _
    // Predicated region
    $region14: #{tpu_custom_call.1} parent=1 // pred_check
      _
    $region15: #{tpu_custom_call.1} parent=1 // pred_check_branch
      %34 = sbr.rel (0) target = $region17
    $region16: #{tpu_custom_call.1} parent=1 // pred_region
      %35 = dma.done [#allocation6], 128
    $region17: #{tpu_custom_call.1} parent=1 // pred_fallthru
      _
    %s36 = smul.u32 0, 8
    %s37 = scvt.s32.f32 %s36
    %v38 = vld [vmem:[#allocation2] sm:$0xff]
    %v39 = vstv %s37
    %v40 = vmul.f32 %v39, %v38
    %v41 = vld [vmem:[#allocation5] sm:$0xff]
    %v42 = vadd.f32 %v40, %v41
    %v43 = vand.u32 2147483647, %v42
    %vm44 = vcmp.le.f32.partialorder %v43, 0.7853982
    %vm45 = vcmp.lt.s32.totalorder %v42, 0
    %v46 = vand.u32 %v42, 2139095040
    %v47 = vshrl.u32 %v46, 23
    %v48 = vsub.s32 %v47, 127
    %v49 = vand.u32 2147483647, %v42
    %v50 = vand.u32 %v49, 8388607
    %v51 = vor.u32 %v50, 8388608
    %v52 = vsub.s32 0, %v51
    %v53 = vadd.s32 %v48, 1
    %vm54 = vcmp.gt.s32.totalorder %v53, 0
    %v55 = vsel %vm54, %v53, 0
    %v56 = vshrl.u32 %v55, 5
    %v57 = vand.u32 %v55, 31
    %v58 = vsub.s32 32, %v57
    %v59 = vshrl.u32 683565275, %v58
    %v60 = vshll.u32 683565275, %v57
    %v61 = vshrl.u32 2475754826, %v58
    %v62 = vor.u32 %v60, %v61
    %v63 = vshll.u32 2475754826, %v57
    %v64 = vshrl.u32 2131351028, %v58
    %v65 = vor.u32 %v63, %v64
    %v66 = vshll.u32 2131351028, %v57
    %v67 = vshrl.u32 2102212464, %v58
    %v68 = vor.u32 %v66, %v67
    %v69 = vshll.u32 2102212464, %v57
    %v70 = vshrl.u32 920167782, %v58
    %v71 = vor.u32 %v69, %v70
    %v72 = vshll.u32 920167782, %v57
    %v73 = vshrl.u32 1326507024, %v58
    %v74 = vor.u32 %v72, %v73
    %vm75 = vcmp.lt.s32.totalorder %v56, 1
    %vm76 = vcmp.lt.s32.totalorder %v56, 2
    %vm77 = vcmp.lt.s32.totalorder %v56, 3
    %vm78 = vcmp.lt.s32.totalorder %v56, 4
    %v79 = vsel %vm75, %v59, %v62
    %v80 = vsel %vm78, %v68, 2102212464
    %v81 = vsel %vm77, %v65, %v80
    %v82 = vsel %vm76, %v79, %v81
    %v83 = vsel %vm75, %v62, %v65
    %v84 = vsel %vm78, %v71, 920167782
    %v85 = vsel %vm77, %v68, %v84
    %v86 = vsel %vm76, %v83, %v85
    %v87 = vsel %vm75, %v65, %v68
    %v88 = vsel %vm78, %v74, 1326507024
    %v89 = vsel %vm77, %v71, %v88
    %v90 = vsel %vm76, %v87, %v89
    %v91 = vshll.u32 %v51, 8
    %v92 = vmul.u32.u64.compose %v91, %v90
    %v93 = vextract.low.u32 %v92
    %v94 = vextract.high.u32 %v92
    %v95 = vmul.u32.u64.compose %v91, %v86
    %v96 = vextract.low.u32 %v95
    %v97 = vextract.high.u32 %v95
    %v98 = vmul.u32 %v91, %v82
    %v99 = vadd.s32 %v94, %v96
    %vm100 = vc.u32 %v94, %v96
    %v101 = vadd.s32 %v97, 1
    %v102 = vsel %vm100, %v101, %v97
    %v103 = vadd.s32 %v98, %v102
    %v104 = vadd.s32 %v103, 536870912
    %v105 = vshrl.u32 %v104, 30
    %v106 = vshll.u32 %v105, 30
    %v107 = vsub.s32 %v103, %v106
    %vm108 = vcmp.lt.s32.totalorder %v107, 0
    %v109 = vsub.s32 0, %v107
    %v110 = vsel %vm108, %v109, %v107
    %v111 = vclz %v110
    %v112 = vsub.s32 %v111, 2
    %vm113 = vcmp.gt.s32.totalorder 0, %v112
    %v114 = vsel %vm113, 0, %v112
    %v115 = vsub.s32 32, %v114
    %v116 = vshll.u32 %v107, %v114
    %v117 = vshrl.u32 %v99, %v115
    %v118 = vor.u32 %v116, %v117
    %v119 = vsub.s32 4294967266, %v114
    %v120 = vadd.s32 %v119, 127
    %v121 = vshll.u32 %v120, 23
    %v122 = vor.u32 4788187, %v121
    %v123 = vand.u32 2147483647, %v122
    %v125 = vcvt.s32.f32 %v118
    %v126 = vmul.f32 %v125, %v123
    %v127 = vxor.u32 %v126, 2147483648
    %v128 = vsel %vm45, %v127, %v126
    %v129 = vsub.s32 4, %v105
    %v130 = vsel %vm45, %v129, %v105
    %v131 = vsel %vm44, %v42, %v128
    %v132 = vsel %vm44, 0, %v130
    %v133 = vcosq.f32.pop %v131
    %v134 = vsinq.f32.pop %v131
    %vm135 = vweird.f32 %v42
    %v136 = vadd.s32 %v132, 3
    %v137 = vand.u32 %v136, 3
    %vm138 = vcmp.lt.s32.totalorder %v137, 2
    %vm139 = vcmp.eq.s32.totalorder %v137, 0
    %v140 = vxor.u32 %v134, 2147483648
    %v141 = vsel %vm139, %v133, %v140
    %vm142 = vcmp.eq.s32.totalorder %v137, 2
    %v143 = vxor.u32 %v133, 2147483648
    %v144 = vsel %vm142, %v143, %v134
    %v145 = vsel %vm138, %v141, %v144
    %v146 = vsel %vm135, nan, %v145
    %147 = vst [vmem:[#allocation7] sm:$0xff] %v146
    // Predicated region
    $region18: #{tpu_custom_call.1} parent=1 // pred_check
      _
    $region19: #{tpu_custom_call.1} parent=1 // pred_check_branch
      %149 = sbr.rel (0) target = $region21
    $region20: #{tpu_custom_call.1} parent=1 // pred_region
      %s151 = ssub.s32 128, 128
      %152 = vsyncadd [#allocation4], %s151
      %s154 = sshll.u32 [#allocation7], 4
      %s155 = int_to_ptr.vmem [resolvable:$true] %s154
      %157 = dma.vmem_to_hbm [thread:$0]  %s155, 128, %s2, [#allocation4]
    $region21: #{tpu_custom_call.1} parent=1 // pred_fallthru
      _
    // Predicated region
    $region22: #{tpu_custom_call.1} parent=1 // pred_check
      _
    $region23: #{tpu_custom_call.1} parent=1 // pred_check_branch
      %159 = sbr.rel (0) target = $region25
    $region24: #{tpu_custom_call.1} parent=1 // pred_region
      %160 = dma.done [#allocation4], 128
    $region25: #{tpu_custom_call.1} parent=1 // pred_fallthru
      _
    %161 = vsyncpa [#allocation3], 1
    %162 = vsyncpa [#allocation6], 1
    %163 = vsyncpa [#allocation4], 1

</llo_original>
